<compile_context>
chip_gen: v7x
topology: tpu7x:2x2x1
jax: 0.10.0
libtpu: 0.0.40
codegen_flags: <defaults>
</compile_context>

<pallas_src>
import jax
import jax.numpy as jnp
from jax import lax
from jax.experimental import pallas as pl
from jax.experimental.pallas import tpu as pltpu


def _round_up(x, m):
    return (x + m - 1) // m * m


def make_rnn_kernel(dt, time_block):
    dt = float(dt)
    one_minus_dt = 1.0 - dt

    def rnn_kernel(xproj_ref, wrecT_ref, h0_ref, hseq_ref, h_scratch):
        # grid = (batch_blocks, time_blocks); time is the inner, sequential axis.
        t = pl.program_id(1)

        @pl.when(t == 0)
        def _():
            # h starts as h0 broadcast over the (padded) batch (h_init='self_h').
            h_scratch[...] = jnp.broadcast_to(h0_ref[...], h_scratch.shape)

        # Loop-invariant recurrent weight: load once per grid step.
        # TODO(synk): for large H, cast wrecT to bf16 (keep the h carry,
        # integration and tanh in f32, preferred_element_type=f32) to use the
        # bf16-native MXU and halve its VMEM footprint.
        wrecT = wrecT_ref[...]

        def step(j, h):
            # rec = tanh(h @ wrec.T + (x_t @ wi + brec))   (xproj precomputed)
            rec = jnp.tanh(
                jnp.dot(h, wrecT, preferred_element_type=jnp.float32)
                + xproj_ref[j]
            )
            # h = (1-dt)*h + dt*rec   (noise_std = 0 -> no noise term)
            h_new = one_minus_dt * h + dt * rec
            hseq_ref[j] = h_new          # lane-dense (B, Hpad) store
            return h_new

        h_scratch[...] = lax.fori_loop(
            0, time_block, step, h_scratch[...], unroll=True
        )

    return rnn_kernel


def rnn_forward_pallas(x_bti, wi, wrec, brec, wo, bo, h0, *, dt=0.5,
                       time_block=8, batch_block=None):
    """x_bti: (B, T, I) float32.  Returns (B, T, O) float32."""
    B, T, I = x_bti.shape
    H = wrec.shape[0]
    O = wo.shape[1]
    f32 = jnp.float32

    # --- padding: H -> multiple of 128 (lane), B -> multiple of 8 (sublane) ---
    Hp = _round_up(H, 128)
    TB = max(1, min(time_block, T))
    Tp = _round_up(T, TB)
    if batch_block is None:
        Bp = _round_up(B, 8)
        BB = Bp
    else:
        BB = _round_up(batch_block, 8)
        Bp = _round_up(B, BB)

    wi_p = jnp.zeros((I, Hp), f32).at[:, :H].set(wi.astype(f32))
    wrecT_p = jnp.zeros((Hp, Hp), f32).at[:H, :H].set(wrec.T.astype(f32))
    brec_p = jnp.zeros((Hp,), f32).at[:H].set(brec.astype(f32))
    wo_p = jnp.zeros((Hp, O), f32).at[:H, :].set(wo.astype(f32))
    h0_p = jnp.zeros((1, Hp), f32).at[0, :H].set(h0.astype(f32))

    # time-major input (the transposed tensor is small: width I)
    x_tbi = jnp.transpose(x_bti.astype(f32), (1, 0, 2))            # (T, B, I)
    x_tbi = jnp.pad(x_tbi, ((0, Tp - T), (0, Bp - B), (0, 0)))     # (Tp, Bp, I)

    # --- hoisted input projection: one (Tp*Bp, I) @ (I, Hp) GEMM + bias ---
    xproj = (x_tbi.reshape(Tp * Bp, I) @ wi_p + brec_p).reshape(Tp, Bp, Hp)

    kernel = make_rnn_kernel(dt, TB)

    h_seq = pl.pallas_call(
        kernel,
        out_shape=jax.ShapeDtypeStruct((Tp, Bp, Hp), f32),
        grid_spec=pltpu.PrefetchScalarGridSpec(
            num_scalar_prefetch=0,
            grid=(Bp // BB, Tp // TB),
            in_specs=[
                pl.BlockSpec((TB, BB, Hp), lambda b, t: (t, b, 0)),  # xproj slab
                pl.BlockSpec((Hp, Hp), lambda b, t: (0, 0)),         # wrec.T (invariant)
                pl.BlockSpec((1, Hp), lambda b, t: (0, 0)),          # h0     (invariant)
            ],
            out_specs=pl.BlockSpec((TB, BB, Hp), lambda b, t: (t, b, 0)),
            scratch_shapes=[pltpu.VMEM((BB, Hp), f32)],              # h carry
        ),
        compiler_params=pltpu.CompilerParams(
            dimension_semantics=("parallel", "arbitrary"),
        ),
    )(xproj, wrecT_p, h0_p)

    # --- deferred readout: one big lane-dense GEMM ---
    out = h_seq.reshape(Tp * Bp, Hp) @ wo_p + bo.astype(f32)        # (Tp*Bp, O)
    out = out.reshape(Tp, Bp, O)[:T, :B, :]
    return jnp.transpose(out, (1, 0, 2))                            # (B, T, O)


def rnn_forward_ref(x_bti, wi, wrec, brec, wo, bo, h0, dt=0.5):
    """Pure-JAX reference mirroring the PyTorch forward (ML_RNN, tanh, id readout)."""
    B = x_bti.shape[0]
    h = jnp.broadcast_to(h0[None, :], (B, h0.shape[0]))

    def step(h, x_t):
        rec = jnp.tanh(h @ wrec.T + x_t @ wi + brec)
        h = (1.0 - dt) * h + dt * rec
        out = h @ wo + bo
        return h, out

    _, outs = lax.scan(step, h, jnp.transpose(x_bti, (1, 0, 2)))
    return jnp.transpose(outs, (1, 0, 2))


if __name__ == "__main__":
    # dims = [input_size, hidden_size, output_size]
    B, T = 2, 8
    I, H, O = 4, 32, 2
    dt = 0.5
    g, g_in = 1.5, 1.0

    key = jax.random.PRNGKey(0)
    k_x, k_wi, k_wrec, k_brec, k_wo, k_h0 = jax.random.split(key, 6)

    # deterministic parameter init matching the PyTorch __init__ distributions
    wi = (g_in / jnp.sqrt(H)) * jax.random.normal(k_wi, (I, H), jnp.float32)
    wrec = (g / jnp.sqrt(H)) * jax.random.normal(k_wrec, (H, H), jnp.float32)
    brec = jax.random.uniform(k_brec, (H,), jnp.float32,
                              minval=-jnp.sqrt(H), maxval=jnp.sqrt(H))
    wo = (1.0 / jnp.sqrt(H)) * jax.random.normal(k_wo, (H, O), jnp.float32)
    bo = jnp.zeros((O,), jnp.float32)
    h0 = jax.random.uniform(k_h0, (H,), jnp.float32, minval=-1.0, maxval=1.0)

    x = jax.random.normal(k_x, (B, T, I), jnp.float32)

    out = rnn_forward_pallas(x, wi, wrec, brec, wo, bo, h0, dt=dt, time_block=8)
    out = jax.block_until_ready(out)

    ref = rnn_forward_ref(x, wi, wrec, brec, wo, bo, h0, dt=dt)
    assert out.shape == (B, T, O)
    assert jnp.allclose(out, ref, atol=1e-4, rtol=1e-4), "mismatch vs reference"

    print("KERNEL_OK")
</pallas_src>

<mosaic_0001>
module attributes {stable_mosaic.version = 11 : i64} {
  func.func @rnn_kernel(%arg0: i32, %arg1: i32, %arg2: memref<8x8x128xf32, #tpu.memory_space<vmem>>, %arg3: memref<128x128xf32, #tpu.memory_space<vmem>>, %arg4: memref<1x128xf32, #tpu.memory_space<vmem>>, %arg5: memref<8x8x128xf32, #tpu.memory_space<vmem>>, %arg6: memref<8x128xf32, #tpu.memory_space<vmem>>) attributes {dimension_semantics = [#tpu.dimension_semantics<parallel>, #tpu.dimension_semantics<arbitrary>], iteration_bounds = array<i64: 1, 1>, scalar_prefetch = 0 : i64, scratch_operands = 1 : i64, tpu.core_type = #tpu.core_type<tc>, window_params = [{transform_indices = @transform_0, window_bounds = array<i64: 8, 8, 128>}, {pipeline_mode = #tpu.pipeline_mode<synchronous>, transform_indices = @transform_1, window_bounds = array<i64: 128, 128>}, {pipeline_mode = #tpu.pipeline_mode<synchronous>, transform_indices = @transform_2, window_bounds = array<i64: 1, 128>}, {transform_indices = @transform_3, window_bounds = array<i64: 8, 8, 128>}]} {
    %c0_i32 = arith.constant 0 : i32
    %0 = arith.cmpi eq, %arg1, %c0_i32 : i32
    %1 = arith.extui %0 : i1 to i32
    %c0_i32_0 = arith.constant 0 : i32
    %2 = arith.cmpi ne, %1, %c0_i32_0 : i32
    scf.if %2 {
      %c0_62 = arith.constant 0 : index
      %c0_63 = arith.constant 0 : index
      %126 = vector.load %arg4[%c0_62, %c0_63] : memref<1x128xf32, #tpu.memory_space<vmem>>, vector<1x128xf32>
      %127 = vector.shape_cast %126 : vector<1x128xf32> to vector<1x128xf32>
      %128 = vector.broadcast %127 : vector<1x128xf32> to vector<8x128xf32>
      %c0_64 = arith.constant 0 : index
      %c0_65 = arith.constant 0 : index
      %129 = vector.load %arg6[%c0_64, %c0_65] : memref<8x128xf32, #tpu.memory_space<vmem>>, vector<8x128xf32>
      tpu.vector_store %arg6[%c0_64, %c0_65], %128 {strides = array<i32>} : memref<8x128xf32, #tpu.memory_space<vmem>>, vector<8x128xf32>,
    } else {
    }
    %c0 = arith.constant 0 : index
    %c0_1 = arith.constant 0 : index
    %3 = vector.load %arg3[%c0, %c0_1] : memref<128x128xf32, #tpu.memory_space<vmem>>, vector<128x128xf32>
    %c0_2 = arith.constant 0 : index
    %c0_3 = arith.constant 0 : index
    %4 = vector.load %arg6[%c0_2, %c0_3] : memref<8x128xf32, #tpu.memory_space<vmem>>, vector<8x128xf32>
    %c0_i32_4 = arith.constant 0 : i32
    %cst = arith.constant dense<0.000000e+00> : vector<8x128xf32>
    %5 = tpu.matmul %4, %3, %cst {dimension_numbers = #tpu.dot_dimension_numbers<[1], [0], [0], [1], [0, 0, 1, 1], [], []>} : vector<8x128xf32>, vector<128x128xf32>, vector<8x128xf32> -> vector<8x128xf32>
    %6 = arith.index_cast %c0_i32_4 : i32 to index
    %c0_5 = arith.constant 0 : index
    %c0_6 = arith.constant 0 : index
    %7 = vector.load %arg2[%6, %c0_5, %c0_6] : memref<8x8x128xf32, #tpu.memory_space<vmem>>, vector<1x8x128xf32>
    %8 = vector.shape_cast %7 : vector<1x8x128xf32> to vector<8x128xf32>
    %9 = arith.addf %5, %8 : vector<8x128xf32>
    %10 = math.tanh %9 : vector<8x128xf32>
    %cst_7 = arith.constant 5.000000e-01 : f32
    %11 = vector.broadcast %cst_7 : f32 to vector<8x128xf32>
    %12 = arith.mulf %11, %4 : vector<8x128xf32>
    %cst_8 = arith.constant 5.000000e-01 : f32
    %13 = vector.broadcast %cst_8 : f32 to vector<8x128xf32>
    %14 = arith.mulf %13, %10 : vector<8x128xf32>
    %15 = arith.addf %12, %14 : vector<8x128xf32>
    %16 = arith.index_cast %c0_i32_4 : i32 to index
    %c0_9 = arith.constant 0 : index
    %c0_10 = arith.constant 0 : index
    %17 = vector.load %arg5[%16, %c0_9, %c0_10] : memref<8x8x128xf32, #tpu.memory_space<vmem>>, vector<1x8x128xf32>
    %18 = vector.shape_cast %17 : vector<1x8x128xf32> to vector<8x128xf32>
    %19 = vector.shape_cast %15 : vector<8x128xf32> to vector<1x8x128xf32>
    tpu.vector_store %arg5[%16, %c0_9, %c0_10], %19 {strides = array<i32>} : memref<8x8x128xf32, #tpu.memory_space<vmem>>, vector<1x8x128xf32>,
    %c1_i32 = arith.constant 1 : i32
    %cst_11 = arith.constant dense<0.000000e+00> : vector<8x128xf32>
    %20 = tpu.matmul %15, %3, %cst_11 {dimension_numbers = #tpu.dot_dimension_numbers<[1], [0], [0], [1], [0, 0, 1, 1], [], []>} : vector<8x128xf32>, vector<128x128xf32>, vector<8x128xf32> -> vector<8x128xf32>
    %21 = arith.index_cast %c1_i32 : i32 to index
    %c0_12 = arith.constant 0 : index
    %c0_13 = arith.constant 0 : index
    %22 = vector.load %arg2[%21, %c0_12, %c0_13] : memref<8x8x128xf32, #tpu.memory_space<vmem>>, vector<1x8x128xf32>
    %23 = vector.shape_cast %22 : vector<1x8x128xf32> to vector<8x128xf32>
    %24 = arith.addf %20, %23 : vector<8x128xf32>
    %25 = math.tanh %24 : vector<8x128xf32>
    %cst_14 = arith.constant 5.000000e-01 : f32
    %26 = vector.broadcast %cst_14 : f32 to vector<8x128xf32>
    %27 = arith.mulf %26, %15 : vector<8x128xf32>
    %cst_15 = arith.constant 5.000000e-01 : f32
    %28 = vector.broadcast %cst_15 : f32 to vector<8x128xf32>
    %29 = arith.mulf %28, %25 : vector<8x128xf32>
    %30 = arith.addf %27, %29 : vector<8x128xf32>
    %31 = arith.index_cast %c1_i32 : i32 to index
    %c0_16 = arith.constant 0 : index
    %c0_17 = arith.constant 0 : index
    %32 = vector.load %arg5[%31, %c0_16, %c0_17] : memref<8x8x128xf32, #tpu.memory_space<vmem>>, vector<1x8x128xf32>
    %33 = vector.shape_cast %32 : vector<1x8x128xf32> to vector<8x128xf32>
    %34 = vector.shape_cast %30 : vector<8x128xf32> to vector<1x8x128xf32>
    tpu.vector_store %arg5[%31, %c0_16, %c0_17], %34 {strides = array<i32>} : memref<8x8x128xf32, #tpu.memory_space<vmem>>, vector<1x8x128xf32>,
    %c2_i32 = arith.constant 2 : i32
    %cst_18 = arith.constant dense<0.000000e+00> : vector<8x128xf32>
    %35 = tpu.matmul %30, %3, %cst_18 {dimension_numbers = #tpu.dot_dimension_numbers<[1], [0], [0], [1], [0, 0, 1, 1], [], []>} : vector<8x128xf32>, vector<128x128xf32>, vector<8x128xf32> -> vector<8x128xf32>
    %36 = arith.index_cast %c2_i32 : i32 to index
    %c0_19 = arith.constant 0 : index
    %c0_20 = arith.constant 0 : index
    %37 = vector.load %arg2[%36, %c0_19, %c0_20] : memref<8x8x128xf32, #tpu.memory_space<vmem>>, vector<1x8x128xf32>
    %38 = vector.shape_cast %37 : vector<1x8x128xf32> to vector<8x128xf32>
    %39 = arith.addf %35, %38 : vector<8x128xf32>
    %40 = math.tanh %39 : vector<8x128xf32>
    %cst_21 = arith.constant 5.000000e-01 : f32
    %41 = vector.broadcast %cst_21 : f32 to vector<8x128xf32>
    %42 = arith.mulf %41, %30 : vector<8x128xf32>
    %cst_22 = arith.constant 5.000000e-01 : f32
    %43 = vector.broadcast %cst_22 : f32 to vector<8x128xf32>
    %44 = arith.mulf %43, %40 : vector<8x128xf32>
    %45 = arith.addf %42, %44 : vector<8x128xf32>
    %46 = arith.index_cast %c2_i32 : i32 to index
    %c0_23 = arith.constant 0 : index
    %c0_24 = arith.constant 0 : index
    %47 = vector.load %arg5[%46, %c0_23, %c0_24] : memref<8x8x128xf32, #tpu.memory_space<vmem>>, vector<1x8x128xf32>
    %48 = vector.shape_cast %47 : vector<1x8x128xf32> to vector<8x128xf32>
    %49 = vector.shape_cast %45 : vector<8x128xf32> to vector<1x8x128xf32>
    tpu.vector_store %arg5[%46, %c0_23, %c0_24], %49 {strides = array<i32>} : memref<8x8x128xf32, #tpu.memory_space<vmem>>, vector<1x8x128xf32>,
    %c3_i32 = arith.constant 3 : i32
    %cst_25 = arith.constant dense<0.000000e+00> : vector<8x128xf32>
    %50 = tpu.matmul %45, %3, %cst_25 {dimension_numbers = #tpu.dot_dimension_numbers<[1], [0], [0], [1], [0, 0, 1, 1], [], []>} : vector<8x128xf32>, vector<128x128xf32>, vector<8x128xf32> -> vector<8x128xf32>
    %51 = arith.index_cast %c3_i32 : i32 to index
    %c0_26 = arith.constant 0 : index
    %c0_27 = arith.constant 0 : index
    %52 = vector.load %arg2[%51, %c0_26, %c0_27] : memref<8x8x128xf32, #tpu.memory_space<vmem>>, vector<1x8x128xf32>
    %53 = vector.shape_cast %52 : vector<1x8x128xf32> to vector<8x128xf32>
    %54 = arith.addf %50, %53 : vector<8x128xf32>
    %55 = math.tanh %54 : vector<8x128xf32>
    %cst_28 = arith.constant 5.000000e-01 : f32
    %56 = vector.broadcast %cst_28 : f32 to vector<8x128xf32>
    %57 = arith.mulf %56, %45 : vector<8x128xf32>
    %cst_29 = arith.constant 5.000000e-01 : f32
    %58 = vector.broadcast %cst_29 : f32 to vector<8x128xf32>
    %59 = arith.mulf %58, %55 : vector<8x128xf32>
    %60 = arith.addf %57, %59 : vector<8x128xf32>
    %61 = arith.index_cast %c3_i32 : i32 to index
    %c0_30 = arith.constant 0 : index
    %c0_31 = arith.constant 0 : index
    %62 = vector.load %arg5[%61, %c0_30, %c0_31] : memref<8x8x128xf32, #tpu.memory_space<vmem>>, vector<1x8x128xf32>
    %63 = vector.shape_cast %62 : vector<1x8x128xf32> to vector<8x128xf32>
    %64 = vector.shape_cast %60 : vector<8x128xf32> to vector<1x8x128xf32>
    tpu.vector_store %arg5[%61, %c0_30, %c0_31], %64 {strides = array<i32>} : memref<8x8x128xf32, #tpu.memory_space<vmem>>, vector<1x8x128xf32>,
    %c4_i32 = arith.constant 4 : i32
    %cst_32 = arith.constant dense<0.000000e+00> : vector<8x128xf32>
    %65 = tpu.matmul %60, %3, %cst_32 {dimension_numbers = #tpu.dot_dimension_numbers<[1], [0], [0], [1], [0, 0, 1, 1], [], []>} : vector<8x128xf32>, vector<128x128xf32>, vector<8x128xf32> -> vector<8x128xf32>
    %66 = arith.index_cast %c4_i32 : i32 to index
    %c0_33 = arith.constant 0 : index
    %c0_34 = arith.constant 0 : index
    %67 = vector.load %arg2[%66, %c0_33, %c0_34] : memref<8x8x128xf32, #tpu.memory_space<vmem>>, vector<1x8x128xf32>
    %68 = vector.shape_cast %67 : vector<1x8x128xf32> to vector<8x128xf32>
    %69 = arith.addf %65, %68 : vector<8x128xf32>
    %70 = math.tanh %69 : vector<8x128xf32>
    %cst_35 = arith.constant 5.000000e-01 : f32
    %71 = vector.broadcast %cst_35 : f32 to vector<8x128xf32>
    %72 = arith.mulf %71, %60 : vector<8x128xf32>
    %cst_36 = arith.constant 5.000000e-01 : f32
    %73 = vector.broadcast %cst_36 : f32 to vector<8x128xf32>
    %74 = arith.mulf %73, %70 : vector<8x128xf32>
    %75 = arith.addf %72, %74 : vector<8x128xf32>
    %76 = arith.index_cast %c4_i32 : i32 to index
    %c0_37 = arith.constant 0 : index
    %c0_38 = arith.constant 0 : index
    %77 = vector.load %arg5[%76, %c0_37, %c0_38] : memref<8x8x128xf32, #tpu.memory_space<vmem>>, vector<1x8x128xf32>
    %78 = vector.shape_cast %77 : vector<1x8x128xf32> to vector<8x128xf32>
    %79 = vector.shape_cast %75 : vector<8x128xf32> to vector<1x8x128xf32>
    tpu.vector_store %arg5[%76, %c0_37, %c0_38], %79 {strides = array<i32>} : memref<8x8x128xf32, #tpu.memory_space<vmem>>, vector<1x8x128xf32>,
    %c5_i32 = arith.constant 5 : i32
    %cst_39 = arith.constant dense<0.000000e+00> : vector<8x128xf32>
    %80 = tpu.matmul %75, %3, %cst_39 {dimension_numbers = #tpu.dot_dimension_numbers<[1], [0], [0], [1], [0, 0, 1, 1], [], []>} : vector<8x128xf32>, vector<128x128xf32>, vector<8x128xf32> -> vector<8x128xf32>
    %81 = arith.index_cast %c5_i32 : i32 to index
    %c0_40 = arith.constant 0 : index
    %c0_41 = arith.constant 0 : index
    %82 = vector.load %arg2[%81, %c0_40, %c0_41] : memref<8x8x128xf32, #tpu.memory_space<vmem>>, vector<1x8x128xf32>
    %83 = vector.shape_cast %82 : vector<1x8x128xf32> to vector<8x128xf32>
    %84 = arith.addf %80, %83 : vector<8x128xf32>
    %85 = math.tanh %84 : vector<8x128xf32>
    %cst_42 = arith.constant 5.000000e-01 : f32
    %86 = vector.broadcast %cst_42 : f32 to vector<8x128xf32>
    %87 = arith.mulf %86, %75 : vector<8x128xf32>
    %cst_43 = arith.constant 5.000000e-01 : f32
    %88 = vector.broadcast %cst_43 : f32 to vector<8x128xf32>
    %89 = arith.mulf %88, %85 : vector<8x128xf32>
    %90 = arith.addf %87, %89 : vector<8x128xf32>
    %91 = arith.index_cast %c5_i32 : i32 to index
    %c0_44 = arith.constant 0 : index
    %c0_45 = arith.constant 0 : index
    %92 = vector.load %arg5[%91, %c0_44, %c0_45] : memref<8x8x128xf32, #tpu.memory_space<vmem>>, vector<1x8x128xf32>
    %93 = vector.shape_cast %92 : vector<1x8x128xf32> to vector<8x128xf32>
    %94 = vector.shape_cast %90 : vector<8x128xf32> to vector<1x8x128xf32>
    tpu.vector_store %arg5[%91, %c0_44, %c0_45], %94 {strides = array<i32>} : memref<8x8x128xf32, #tpu.memory_space<vmem>>, vector<1x8x128xf32>,
    %c6_i32 = arith.constant 6 : i32
    %cst_46 = arith.constant dense<0.000000e+00> : vector<8x128xf32>
    %95 = tpu.matmul %90, %3, %cst_46 {dimension_numbers = #tpu.dot_dimension_numbers<[1], [0], [0], [1], [0, 0, 1, 1], [], []>} : vector<8x128xf32>, vector<128x128xf32>, vector<8x128xf32> -> vector<8x128xf32>
    %96 = arith.index_cast %c6_i32 : i32 to index
    %c0_47 = arith.constant 0 : index
    %c0_48 = arith.constant 0 : index
    %97 = vector.load %arg2[%96, %c0_47, %c0_48] : memref<8x8x128xf32, #tpu.memory_space<vmem>>, vector<1x8x128xf32>
    %98 = vector.shape_cast %97 : vector<1x8x128xf32> to vector<8x128xf32>
    %99 = arith.addf %95, %98 : vector<8x128xf32>
    %100 = math.tanh %99 : vector<8x128xf32>
    %cst_49 = arith.constant 5.000000e-01 : f32
    %101 = vector.broadcast %cst_49 : f32 to vector<8x128xf32>
    %102 = arith.mulf %101, %90 : vector<8x128xf32>
    %cst_50 = arith.constant 5.000000e-01 : f32
    %103 = vector.broadcast %cst_50 : f32 to vector<8x128xf32>
    %104 = arith.mulf %103, %100 : vector<8x128xf32>
    %105 = arith.addf %102, %104 : vector<8x128xf32>
    %106 = arith.index_cast %c6_i32 : i32 to index
    %c0_51 = arith.constant 0 : index
    %c0_52 = arith.constant 0 : index
    %107 = vector.load %arg5[%106, %c0_51, %c0_52] : memref<8x8x128xf32, #tpu.memory_space<vmem>>, vector<1x8x128xf32>
    %108 = vector.shape_cast %107 : vector<1x8x128xf32> to vector<8x128xf32>
    %109 = vector.shape_cast %105 : vector<8x128xf32> to vector<1x8x128xf32>
    tpu.vector_store %arg5[%106, %c0_51, %c0_52], %109 {strides = array<i32>} : memref<8x8x128xf32, #tpu.memory_space<vmem>>, vector<1x8x128xf32>,
    %c7_i32 = arith.constant 7 : i32
    %cst_53 = arith.constant dense<0.000000e+00> : vector<8x128xf32>
    %110 = tpu.matmul %105, %3, %cst_53 {dimension_numbers = #tpu.dot_dimension_numbers<[1], [0], [0], [1], [0, 0, 1, 1], [], []>} : vector<8x128xf32>, vector<128x128xf32>, vector<8x128xf32> -> vector<8x128xf32>
    %111 = arith.index_cast %c7_i32 : i32 to index
    %c0_54 = arith.constant 0 : index
    %c0_55 = arith.constant 0 : index
    %112 = vector.load %arg2[%111, %c0_54, %c0_55] : memref<8x8x128xf32, #tpu.memory_space<vmem>>, vector<1x8x128xf32>
    %113 = vector.shape_cast %112 : vector<1x8x128xf32> to vector<8x128xf32>
    %114 = arith.addf %110, %113 : vector<8x128xf32>
    %115 = math.tanh %114 : vector<8x128xf32>
    %cst_56 = arith.constant 5.000000e-01 : f32
    %116 = vector.broadcast %cst_56 : f32 to vector<8x128xf32>
    %117 = arith.mulf %116, %105 : vector<8x128xf32>
    %cst_57 = arith.constant 5.000000e-01 : f32
    %118 = vector.broadcast %cst_57 : f32 to vector<8x128xf32>
    %119 = arith.mulf %118, %115 : vector<8x128xf32>
    %120 = arith.addf %117, %119 : vector<8x128xf32>
    %121 = arith.index_cast %c7_i32 : i32 to index
    %c0_58 = arith.constant 0 : index
    %c0_59 = arith.constant 0 : index
    %122 = vector.load %arg5[%121, %c0_58, %c0_59] : memref<8x8x128xf32, #tpu.memory_space<vmem>>, vector<1x8x128xf32>
    %123 = vector.shape_cast %122 : vector<1x8x128xf32> to vector<8x128xf32>
    %124 = vector.shape_cast %120 : vector<8x128xf32> to vector<1x8x128xf32>
    tpu.vector_store %arg5[%121, %c0_58, %c0_59], %124 {strides = array<i32>} : memref<8x8x128xf32, #tpu.memory_space<vmem>>, vector<1x8x128xf32>,
    %c8_i32 = arith.constant 8 : i32
    %c0_60 = arith.constant 0 : index
    %c0_61 = arith.constant 0 : index
    %125 = vector.load %arg6[%c0_60, %c0_61] : memref<8x128xf32, #tpu.memory_space<vmem>>, vector<8x128xf32>
    tpu.vector_store %arg6[%c0_60, %c0_61], %120 {strides = array<i32>} : memref<8x128xf32, #tpu.memory_space<vmem>>, vector<8x128xf32>,
    return
  }
  func.func @transform_0(%arg0: i32, %arg1: i32) -> (i32, i32, i32) {
    %c0_i32 = arith.constant 0 : i32
    %c0_i32_0 = arith.constant 0 : i32
    return %arg1, %arg0, %c0_i32 : i32, i32, i32
  }
  func.func @transform_1(%arg0: i32, %arg1: i32) -> (i32, i32) {
    %c0_i32 = arith.constant 0 : i32
    %c0_i32_0 = arith.constant 0 : i32
    %c0_i32_1 = arith.constant 0 : i32
    return %c0_i32, %c0_i32_0 : i32, i32
  }
  func.func @transform_2(%arg0: i32, %arg1: i32) -> (i32, i32) {
    %c0_i32 = arith.constant 0 : i32
    %c0_i32_0 = arith.constant 0 : i32
    %c0_i32_1 = arith.constant 0 : i32
    return %c0_i32, %c0_i32_0 : i32, i32
  }
  func.func @transform_3(%arg0: i32, %arg1: i32) -> (i32, i32, i32) {
    %c0_i32 = arith.constant 0 : i32
    %c0_i32_0 = arith.constant 0 : i32
    return %arg1, %arg0, %c0_i32 : i32, i32, i32
  }
}

</mosaic_0001>

<llo_original>
// kernel: tpu_custom_call.1
$region0: #{tpu_custom_call.1}
  #allocation0 [shape = 'u32[]', space=smem, size = 0x4, offset = 0x4, fixed_abs, tag = 'smem constant byte address 0x4 - core index']
  #allocation1 [shape = 'u32[144,128]{1,0:T(1,128)}', space=vmem, size = 0x12000, scoped, tag = 'internal scratch']
  #allocation2 [shape = 'f32[8,128]{1,0:T(8,128)}', space=vmem, size = 0x1000, scoped, tag = 'scratch operand']
  %s0 = inlined_call_operand.hbm [shape: f32[8,8,128], index: 0, kind: input, shape index: {}]
  %s1 = inlined_call_operand.hbm [shape: f32[128,128], index: 1, kind: input, shape index: {}]
  %s2 = inlined_call_operand.vmem [shape: f32[1,128], index: 2, kind: input, shape index: {}]
  %s3 = inlined_call_operand.hbm [shape: f32[8,8,128], index: 3, kind: output, shape index: {}]
  %s4 = sld [smem:[#allocation0]]
  $region34: #{tpu_custom_call.1} parent=0
    _
  %s6 = ssub.s32 1, %s4
  %s7 = scalar_select 0, %s6, %s4
  $region1: #{tpu_custom_call.1} parent=0
    #allocation3 [shape = 'u8[32768]{0}', space=vmem, size = 0x8000, scoped, tag = 'input window, operand 0, single buffered']
    #allocation4 [shape = 's32[1]{0}', space=sflag, size = 0x4, scoped, tag = 'scoped memory for tpu_custom_call.1']
    #allocation5 [shape = 's32[1]{0}', space=sflag, size = 0x4, scoped, tag = 'scoped memory for tpu_custom_call.1']
    #allocation6 [shape = 'u8[65536]{0}', space=vmem, size = 0x10000, scoped, tag = 'input window, operand 1, single buffered']
    #allocation7 [shape = 's32[1]{0}', space=sflag, size = 0x4, scoped, tag = 'scoped memory for tpu_custom_call.1']
    #allocation8 [shape = 'u8[32768]{0}', space=vmem, size = 0x8000, scoped, tag = 'output window, operand 0, single buffered']
    %8 = vsyncpa [#allocation4], 0
    %9 = vsyncpa [#allocation7], 0
    %10 = vsyncpa [#allocation5], 0
    // Predicated region
    $region2: #{tpu_custom_call.1} parent=1 // pred_check
      _
    $region3: #{tpu_custom_call.1} parent=1 // pred_check_branch
      %12 = sbr.rel (0) target = $region5
    $region4: #{tpu_custom_call.1} parent=1 // pred_region
      %s14 = ssub.s32 1024, 1024
      %15 = vsyncadd [#allocation4], %s14
      %s16 = sshll.u32 [#allocation3], 4
      %s17 = int_to_ptr.vmem [resolvable:$true] %s16
      %22 = dma.hbm_to_vmem [thread:$0]  %s0, 1024, %s17, [#allocation4], 128, 128, 8
    $region5: #{tpu_custom_call.1} parent=1 // pred_fallthru
      _
    // Predicated region
    $region6: #{tpu_custom_call.1} parent=1 // pred_check
      _
    $region7: #{tpu_custom_call.1} parent=1 // pred_check_branch
      %24 = sbr.rel (0) target = $region9
    $region8: #{tpu_custom_call.1} parent=1 // pred_region
      %s26 = ssub.s32 2048, 2048
      %27 = vsyncadd [#allocation7], %s26
      %s28 = sshll.u32 [#allocation6], 4
      %s29 = int_to_ptr.vmem [resolvable:$true] %s28
      %34 = dma.hbm_to_vmem [thread:$0]  %s1, 2048, %s29, [#allocation7], 128, 128, 8
    $region9: #{tpu_custom_call.1} parent=1 // pred_fallthru
      _
    // Predicated region
    $region10: #{tpu_custom_call.1} parent=1 // pred_check
      _
    $region11: #{tpu_custom_call.1} parent=1 // pred_check_branch
      %36 = sbr.rel (0) target = $region13
    $region12: #{tpu_custom_call.1} parent=1 // pred_region
      _
    $region13: #{tpu_custom_call.1} parent=1 // pred_fallthru
      _
    // Predicated region
    $region14: #{tpu_custom_call.1} parent=1 // pred_check
      _
    $region15: #{tpu_custom_call.1} parent=1 // pred_check_branch
      %38 = sbr.rel (0) target = $region17
    $region16: #{tpu_custom_call.1} parent=1 // pred_region
      %39 = dma.done [#allocation4], 1024
    $region17: #{tpu_custom_call.1} parent=1 // pred_fallthru
      _
    // Predicated region
    $region18: #{tpu_custom_call.1} parent=1 // pred_check
      _
    $region19: #{tpu_custom_call.1} parent=1 // pred_check_branch
      %41 = sbr.rel (0) target = $region21
    $region20: #{tpu_custom_call.1} parent=1 // pred_region
      %42 = dma.done [#allocation7], 2048
    $region21: #{tpu_custom_call.1} parent=1 // pred_fallthru
      _
    %p43 = scmp.eq.s32.totalorder 0, 0
    // Predicated region
    $region22: #{tpu_custom_call.1} parent=1 // pred_check
      %p44 = pneg %p43
    $region23: #{tpu_custom_call.1} parent=1 // pred_check_branch
      %46 = sbr.rel (%p44) target = $region25
    $region24: #{tpu_custom_call.1} parent=1 // pred_region
      %v47 = vld [vmem:[%s2] sm:$0x1]
      %v49 = vlaneseq
      %v50 = vshrl.u32 %v49, 7
      %v51 = vsub.s32 0, %v50
      %v52 = vrot.slane %v47, %v51
      %54 = vst [vmem:[#allocation2] sm:$0xff] %v52
    $region25: #{tpu_custom_call.1} parent=1 // pred_fallthru
      _
    %v55 = vld [vmem:[#allocation6] sm:$0xff]
    %v56 = vld [vmem:[#allocation6 + $0x8] sm:$0xff]
    %v57 = vld [vmem:[#allocation6 + $0x10] sm:$0xff]
    %v58 = vld [vmem:[#allocation6 + $0x18] sm:$0xff]
    %v59 = vld [vmem:[#allocation6 + $0x20] sm:$0xff]
    %v60 = vld [vmem:[#allocation6 + $0x28] sm:$0xff]
    %v61 = vld [vmem:[#allocation6 + $0x30] sm:$0xff]
    %v62 = vld [vmem:[#allocation6 + $0x38] sm:$0xff]
    %v63 = vld [vmem:[#allocation6 + $0x40] sm:$0xff]
    %v64 = vld [vmem:[#allocation6 + $0x48] sm:$0xff]
    %v65 = vld [vmem:[#allocation6 + $0x50] sm:$0xff]
    %v66 = vld [vmem:[#allocation6 + $0x58] sm:$0xff]
    %v67 = vld [vmem:[#allocation6 + $0x60] sm:$0xff]
    %v68 = vld [vmem:[#allocation6 + $0x68] sm:$0xff]
    %v69 = vld [vmem:[#allocation6 + $0x70] sm:$0xff]
    %v70 = vld [vmem:[#allocation6 + $0x78] sm:$0xff]
    %v71 = vld [vmem:[#allocation2] sm:$0xff]
    %v72 = vld [vmem:[#allocation3] sm:$0xff]
    %73 = vmatprep.subr.mxu0 0.0
    %74 = vmatpush1.msra.mxu0 %v55
    %75 = vmatprep.subr.mxu0 0.0
    %76 = vmatpush1.msra.mxu0 %v56
    %77 = vmatprep.subr.mxu0 0.0
    %78 = vmatpush1.msra.mxu0 %v57
    %79 = vmatprep.subr.mxu0 0.0
    %80 = vmatpush1.msra.mxu0 %v58
    %81 = vmatprep.subr.mxu0 0.0
    %82 = vmatpush1.msra.mxu0 %v59
    %83 = vmatprep.subr.mxu0 0.0
    %84 = vmatpush1.msra.mxu0 %v60
    %85 = vmatprep.subr.mxu0 0.0
    %86 = vmatpush1.msra.mxu0 %v61
    %87 = vmatprep.subr.mxu0 0.0
    %88 = vmatpush1.msra.mxu0 %v62
    %89 = vmatprep.subr.mxu0 0.0
    %90 = vmatpush1.msra.mxu0 %v63
    %91 = vmatprep.subr.mxu0 0.0
    %92 = vmatpush1.msra.mxu0 %v64
    %93 = vmatprep.subr.mxu0 0.0
    %94 = vmatpush1.msra.mxu0 %v65
    %95 = vmatprep.subr.mxu0 0.0
    %96 = vmatpush1.msra.mxu0 %v66
    %97 = vmatprep.subr.mxu0 0.0
    %98 = vmatpush1.msra.mxu0 %v67
    %99 = vmatprep.subr.mxu0 0.0
    %100 = vmatpush1.msra.mxu0 %v68
    %101 = vmatprep.subr.mxu0 0.0
    %102 = vmatpush1.msra.mxu0 %v69
    %103 = vmatprep.subr.mxu0 0.0
    %104 = vmatpush1.msra.mxu0 %v70
    %105 = vmatprep.subr.mxu0 0.0
    %106 = vmatpush1.msra.mxu0 0.0
    %107 = vmatprep.subr.mxu0 0.0
    %108 = vmatpush1.msra.mxu0 0.0
    %109 = vmatprep.subr.mxu0 0.0
    %110 = vmatpush1.msra.mxu0 0.0
    %111 = vmatprep.subr.mxu0 0.0
    %112 = vmatpush1.msra.mxu0 0.0
    %113 = vmatprep.subr.mxu0 0.0
    %114 = vmatpush1.msra.mxu0 0.0
    %115 = vmatprep.subr.mxu0 0.0
    %116 = vmatpush1.msra.mxu0 0.0
    %117 = vmatprep.subr.mxu0 0.0
    %118 = vmatpush1.msra.mxu0 0.0
    %119 = vmatprep.subr.mxu0 0.0
    %120 = vmatpush1.msra.mxu0 0.0
    %121 = vmatprep.subr.mxu0 0.0
    %122 = vmatpush1.msra.mxu0 0.0
    %123 = vmatprep.subr.mxu0 0.0
    %124 = vmatpush1.msra.mxu0 0.0
    %125 = vmatprep.subr.mxu0 0.0
    %126 = vmatpush1.msra.mxu0 0.0
    %127 = vmatprep.subr.mxu0 0.0
    %128 = vmatpush1.msra.mxu0 0.0
    %129 = vmatprep.subr.mxu0 0.0
    %130 = vmatpush1.msra.mxu0 0.0
    %131 = vmatprep.subr.mxu0 0.0
    %132 = vmatpush1.msra.mxu0 0.0
    %133 = vmatprep.subr.mxu0 0.0
    %134 = vmatpush1.msra.mxu0 0.0
    %135 = vmatprep.subr.mxu0 0.0
    %136 = vmatpush1.msra.mxu0 0.0
    %137 = vmatprep.mubr.f32.mxu0 0.0
    %138 = vmatmul.mubr.f32.gmra.mrb[0].mxu0 %v71
    %v139 = vpop.f32.mrb[0].mxu0
    %v140 = vadd.f32 %v72, %v139
    %v141 = vpop.f32.mrb[0].mxu0
    %142 = vdwg.mxu0
    %v143 = vtanh.pop %v140
    %v144 = vmul.f32 %v71, 0.5
    %v145 = vmul.f32 %v143, 0.5
    %v146 = vadd.f32 %v144, %v145
    %147 = vst [vmem:[#allocation8] sm:$0xff] %v146
    %s148 = scalar_lea.vmem [#allocation3], 8
    %v149 = vld [vmem:[%s148] sm:$0xff]
    %150 = vmatprep.subr.mxu0 0.0
    %151 = vmatpush1.msra.mxu0 %v55
    %152 = vmatprep.subr.mxu0 0.0
    %153 = vmatpush1.msra.mxu0 %v56
    %154 = vmatprep.subr.mxu0 0.0
    %155 = vmatpush1.msra.mxu0 %v57
    %156 = vmatprep.subr.mxu0 0.0
    %157 = vmatpush1.msra.mxu0 %v58
    %158 = vmatprep.subr.mxu0 0.0
    %159 = vmatpush1.msra.mxu0 %v59
    %160 = vmatprep.subr.mxu0 0.0
    %161 = vmatpush1.msra.mxu0 %v60
    %162 = vmatprep.subr.mxu0 0.0
    %163 = vmatpush1.msra.mxu0 %v61
    %164 = vmatprep.subr.mxu0 0.0
    %165 = vmatpush1.msra.mxu0 %v62
    %166 = vmatprep.subr.mxu0 0.0
    %167 = vmatpush1.msra.mxu0 %v63
    %168 = vmatprep.subr.mxu0 0.0
    %169 = vmatpush1.msra.mxu0 %v64
    %170 = vmatprep.subr.mxu0 0.0
    %171 = vmatpush1.msra.mxu0 %v65
    %172 = vmatprep.subr.mxu0 0.0
    %173 = vmatpush1.msra.mxu0 %v66
    %174 = vmatprep.subr.mxu0 0.0
    %175 = vmatpush1.msra.mxu0 %v67
    %176 = vmatprep.subr.mxu0 0.0
    %177 = vmatpush1.msra.mxu0 %v68
    %178 = vmatprep.subr.mxu0 0.0
    %179 = vmatpush1.msra.mxu0 %v69
    %180 = vmatprep.subr.mxu0 0.0
    %181 = vmatpush1.msra.mxu0 %v70
    %182 = vmatprep.subr.mxu0 0.0
    %183 = vmatpush1.msra.mxu0 0.0
    %184 = vmatprep.subr.mxu0 0.0
    %185 = vmatpush1.msra.mxu0 0.0
    %186 = vmatprep.subr.mxu0 0.0
    %187 = vmatpush1.msra.mxu0 0.0
    %188 = vmatprep.subr.mxu0 0.0
    %189 = vmatpush1.msra.mxu0 0.0
    %190 = vmatprep.subr.mxu0 0.0
    %191 = vmatpush1.msra.mxu0 0.0
    %192 = vmatprep.subr.mxu0 0.0
    %193 = vmatpush1.msra.mxu0 0.0
    %194 = vmatprep.subr.mxu0 0.0
    %195 = vmatpush1.msra.mxu0 0.0
    %196 = vmatprep.subr.mxu0 0.0
    %197 = vmatpush1.msra.mxu0 0.0
    %198 = vmatprep.subr.mxu0 0.0
    %199 = vmatpush1.msra.mxu0 0.0
    %200 = vmatprep.subr.mxu0 0.0
    %201 = vmatpush1.msra.mxu0 0.0
    %202 = vmatprep.subr.mxu0 0.0
    %203 = vmatpush1.msra.mxu0 0.0
    %204 = vmatprep.subr.mxu0 0.0
    %205 = vmatpush1.msra.mxu0 0.0
    %206 = vmatprep.subr.mxu0 0.0
    %207 = vmatpush1.msra.mxu0 0.0
    %208 = vmatprep.subr.mxu0 0.0
    %209 = vmatpush1.msra.mxu0 0.0
    %210 = vmatprep.subr.mxu0 0.0
    %211 = vmatpush1.msra.mxu0 0.0
    %212 = vmatprep.subr.mxu0 0.0
    %213 = vmatpush1.msra.mxu0 0.0
    %214 = vmatprep.mubr.f32.mxu0 0.0
    %215 = vmatmul.mubr.f32.gmra.mrb[0].mxu0 %v146
    %v216 = vpop.f32.mrb[0].mxu0
    %v217 = vadd.f32 %v149, %v216
    %v218 = vpop.f32.mrb[0].mxu0
    %219 = vdwg.mxu0
    %v220 = vtanh.pop %v217
    %v221 = vmul.f32 %v146, 0.5
    %v222 = vmul.f32 %v220, 0.5
    %v223 = vadd.f32 %v221, %v222
    %s224 = scalar_lea.vmem [#allocation8], 8
    %225 = vst [vmem:[%s224] sm:$0xff] %v223
    %s226 = scalar_lea.vmem [#allocation3], 16
    %v227 = vld [vmem:[%s226] sm:$0xff]
    %228 = vmatprep.subr.mxu0 0.0
    %229 = vmatpush1.msra.mxu0 %v55
    %230 = vmatprep.subr.mxu0 0.0
    %231 = vmatpush1.msra.mxu0 %v56
    %232 = vmatprep.subr.mxu0 0.0
    %233 = vmatpush1.msra.mxu0 %v57
    %234 = vmatprep.subr.mxu0 0.0
    %235 = vmatpush1.msra.mxu0 %v58
    %236 = vmatprep.subr.mxu0 0.0
    %237 = vmatpush1.msra.mxu0 %v59
    %238 = vmatprep.subr.mxu0 0.0
    %239 = vmatpush1.msra.mxu0 %v60
    %240 = vmatprep.subr.mxu0 0.0
    %241 = vmatpush1.msra.mxu0 %v61
    %242 = vmatprep.subr.mxu0 0.0
    %243 = vmatpush1.msra.mxu0 %v62
    %244 = vmatprep.subr.mxu0 0.0
    %245 = vmatpush1.msra.mxu0 %v63
    %246 = vmatprep.subr.mxu0 0.0
    %247 = vmatpush1.msra.mxu0 %v64
    %248 = vmatprep.subr.mxu0 0.0
    %249 = vmatpush1.msra.mxu0 %v65
    %250 = vmatprep.subr.mxu0 0.0
    %251 = vmatpush1.msra.mxu0 %v66
    %252 = vmatprep.subr.mxu0 0.0
    %253 = vmatpush1.msra.mxu0 %v67
    %254 = vmatprep.subr.mxu0 0.0
    %255 = vmatpush1.msra.mxu0 %v68
    %256 = vmatprep.subr.mxu0 0.0
    %257 = vmatpush1.msra.mxu0 %v69
    %258 = vmatprep.subr.mxu0 0.0
    %259 = vmatpush1.msra.mxu0 %v70
    %260 = vmatprep.subr.mxu0 0.0
    %261 = vmatpush1.msra.mxu0 0.0
    %262 = vmatprep.subr.mxu0 0.0
    %263 = vmatpush1.msra.mxu0 0.0
    %264 = vmatprep.subr.mxu0 0.0
    %265 = vmatpush1.msra.mxu0 0.0
    %266 = vmatprep.subr.mxu0 0.0
    %267 = vmatpush1.msra.mxu0 0.0
    %268 = vmatprep.subr.mxu0 0.0
    %269 = vmatpush1.msra.mxu0 0.0
    %270 = vmatprep.subr.mxu0 0.0
    %271 = vmatpush1.msra.mxu0 0.0
    %272 = vmatprep.subr.mxu0 0.0
    %273 = vmatpush1.msra.mxu0 0.0
    %274 = vmatprep.subr.mxu0 0.0
    %275 = vmatpush1.msra.mxu0 0.0
    %276 = vmatprep.subr.mxu0 0.0
    %277 = vmatpush1.msra.mxu0 0.0
    %278 = vmatprep.subr.mxu0 0.0
    %279 = vmatpush1.msra.mxu0 0.0
    %280 = vmatprep.subr.mxu0 0.0
    %281 = vmatpush1.msra.mxu0 0.0
    %282 = vmatprep.subr.mxu0 0.0
    %283 = vmatpush1.msra.mxu0 0.0
    %284 = vmatprep.subr.mxu0 0.0
    %285 = vmatpush1.msra.mxu0 0.0
    %286 = vmatprep.subr.mxu0 0.0
    %287 = vmatpush1.msra.mxu0 0.0
    %288 = vmatprep.subr.mxu0 0.0
    %289 = vmatpush1.msra.mxu0 0.0
    %290 = vmatprep.subr.mxu0 0.0
    %291 = vmatpush1.msra.mxu0 0.0
    %292 = vmatprep.mubr.f32.mxu0 0.0
    %293 = vmatmul.mubr.f32.gmra.mrb[0].mxu0 %v223
    %v294 = vpop.f32.mrb[0].mxu0
    %v295 = vadd.f32 %v227, %v294
    %v296 = vpop.f32.mrb[0].mxu0
    %297 = vdwg.mxu0
    %v298 = vtanh.pop %v295
    %v299 = vmul.f32 %v223, 0.5
    %v300 = vmul.f32 %v298, 0.5
    %v301 = vadd.f32 %v299, %v300
    %s302 = scalar_lea.vmem [#allocation8], 16
    %303 = vst [vmem:[%s302] sm:$0xff] %v301
    %s304 = scalar_lea.vmem [#allocation3], 24
    %v305 = vld [vmem:[%s304] sm:$0xff]
    %306 = vmatprep.subr.mxu0 0.0
    %307 = vmatpush1.msra.mxu0 %v55
    %308 = vmatprep.subr.mxu0 0.0
    %309 = vmatpush1.msra.mxu0 %v56
    %310 = vmatprep.subr.mxu0 0.0
    %311 = vmatpush1.msra.mxu0 %v57
    %312 = vmatprep.subr.mxu0 0.0
    %313 = vmatpush1.msra.mxu0 %v58
    %314 = vmatprep.subr.mxu0 0.0
    %315 = vmatpush1.msra.mxu0 %v59
    %316 = vmatprep.subr.mxu0 0.0
    %317 = vmatpush1.msra.mxu0 %v60
    %318 = vmatprep.subr.mxu0 0.0
    %319 = vmatpush1.msra.mxu0 %v61
    %320 = vmatprep.subr.mxu0 0.0
    %321 = vmatpush1.msra.mxu0 %v62
    %322 = vmatprep.subr.mxu0 0.0
    %323 = vmatpush1.msra.mxu0 %v63
    %324 = vmatprep.subr.mxu0 0.0
    %325 = vmatpush1.msra.mxu0 %v64
    %326 = vmatprep.subr.mxu0 0.0
    %327 = vmatpush1.msra.mxu0 %v65
    %328 = vmatprep.subr.mxu0 0.0
    %329 = vmatpush1.msra.mxu0 %v66
    %330 = vmatprep.subr.mxu0 0.0
    %331 = vmatpush1.msra.mxu0 %v67
    %332 = vmatprep.subr.mxu0 0.0
    %333 = vmatpush1.msra.mxu0 %v68
    %334 = vmatprep.subr.mxu0 0.0
    %335 = vmatpush1.msra.mxu0 %v69
    %336 = vmatprep.subr.mxu0 0.0
    %337 = vmatpush1.msra.mxu0 %v70
    %338 = vmatprep.subr.mxu0 0.0
    %339 = vmatpush1.msra.mxu0 0.0
    %340 = vmatprep.subr.mxu0 0.0
    %341 = vmatpush1.msra.mxu0 0.0
    %342 = vmatprep.subr.mxu0 0.0
    %343 = vmatpush1.msra.mxu0 0.0
    %344 = vmatprep.subr.mxu0 0.0
    %345 = vmatpush1.msra.mxu0 0.0
    %346 = vmatprep.subr.mxu0 0.0
    %347 = vmatpush1.msra.mxu0 0.0
    %348 = vmatprep.subr.mxu0 0.0
    %349 = vmatpush1.msra.mxu0 0.0
    %350 = vmatprep.subr.mxu0 0.0
    %351 = vmatpush1.msra.mxu0 0.0
    %352 = vmatprep.subr.mxu0 0.0
    %353 = vmatpush1.msra.mxu0 0.0
    %354 = vmatprep.subr.mxu0 0.0
    %355 = vmatpush1.msra.mxu0 0.0
    %356 = vmatprep.subr.mxu0 0.0
    %357 = vmatpush1.msra.mxu0 0.0
    %358 = vmatprep.subr.mxu0 0.0
    %359 = vmatpush1.msra.mxu0 0.0
    %360 = vmatprep.subr.mxu0 0.0
    %361 = vmatpush1.msra.mxu0 0.0
    %362 = vmatprep.subr.mxu0 0.0
    %363 = vmatpush1.msra.mxu0 0.0
    %364 = vmatprep.subr.mxu0 0.0
    %365 = vmatpush1.msra.mxu0 0.0
    %366 = vmatprep.subr.mxu0 0.0
    %367 = vmatpush1.msra.mxu0 0.0
    %368 = vmatprep.subr.mxu0 0.0
    %369 = vmatpush1.msra.mxu0 0.0
    %370 = vmatprep.mubr.f32.mxu0 0.0
    %371 = vmatmul.mubr.f32.gmra.mrb[0].mxu0 %v301
    %v372 = vpop.f32.mrb[0].mxu0
    %v373 = vadd.f32 %v305, %v372
    %v374 = vpop.f32.mrb[0].mxu0
    %375 = vdwg.mxu0
    %v376 = vtanh.pop %v373
    %v377 = vmul.f32 %v301, 0.5
    %v378 = vmul.f32 %v376, 0.5
    %v379 = vadd.f32 %v377, %v378
    %s380 = scalar_lea.vmem [#allocation8], 24
    %381 = vst [vmem:[%s380] sm:$0xff] %v379
    %s382 = scalar_lea.vmem [#allocation3], 32
    %v383 = vld [vmem:[%s382] sm:$0xff]
    %384 = vmatprep.subr.mxu0 0.0
    %385 = vmatpush1.msra.mxu0 %v55
    %386 = vmatprep.subr.mxu0 0.0
    %387 = vmatpush1.msra.mxu0 %v56
    %388 = vmatprep.subr.mxu0 0.0
    %389 = vmatpush1.msra.mxu0 %v57
    %390 = vmatprep.subr.mxu0 0.0
    %391 = vmatpush1.msra.mxu0 %v58
    %392 = vmatprep.subr.mxu0 0.0
    %393 = vmatpush1.msra.mxu0 %v59
    %394 = vmatprep.subr.mxu0 0.0
    %395 = vmatpush1.msra.mxu0 %v60
    %396 = vmatprep.subr.mxu0 0.0
    %397 = vmatpush1.msra.mxu0 %v61
    %398 = vmatprep.subr.mxu0 0.0
    %399 = vmatpush1.msra.mxu0 %v62
    %400 = vmatprep.subr.mxu0 0.0
    %401 = vmatpush1.msra.mxu0 %v63
    %402 = vmatprep.subr.mxu0 0.0
    %403 = vmatpush1.msra.mxu0 %v64
    %404 = vmatprep.subr.mxu0 0.0
    %405 = vmatpush1.msra.mxu0 %v65
    %406 = vmatprep.subr.mxu0 0.0
    %407 = vmatpush1.msra.mxu0 %v66
    %408 = vmatprep.subr.mxu0 0.0
    %409 = vmatpush1.msra.mxu0 %v67
    %410 = vmatprep.subr.mxu0 0.0
    %411 = vmatpush1.msra.mxu0 %v68
    %412 = vmatprep.subr.mxu0 0.0
    %413 = vmatpush1.msra.mxu0 %v69
    %414 = vmatprep.subr.mxu0 0.0
    %415 = vmatpush1.msra.mxu0 %v70
    %416 = vmatprep.subr.mxu0 0.0
    %417 = vmatpush1.msra.mxu0 0.0
    %418 = vmatprep.subr.mxu0 0.0
    %419 = vmatpush1.msra.mxu0 0.0
    %420 = vmatprep.subr.mxu0 0.0
    %421 = vmatpush1.msra.mxu0 0.0
    %422 = vmatprep.subr.mxu0 0.0
    %423 = vmatpush1.msra.mxu0 0.0
    %424 = vmatprep.subr.mxu0 0.0
    %425 = vmatpush1.msra.mxu0 0.0
    %426 = vmatprep.subr.mxu0 0.0
    %427 = vmatpush1.msra.mxu0 0.0
    %428 = vmatprep.subr.mxu0 0.0
    %429 = vmatpush1.msra.mxu0 0.0
    %430 = vmatprep.subr.mxu0 0.0
    %431 = vmatpush1.msra.mxu0 0.0
    %432 = vmatprep.subr.mxu0 0.0
    %433 = vmatpush1.msra.mxu0 0.0
    %434 = vmatprep.subr.mxu0 0.0
    %435 = vmatpush1.msra.mxu0 0.0
    %436 = vmatprep.subr.mxu0 0.0
    %437 = vmatpush1.msra.mxu0 0.0
    %438 = vmatprep.subr.mxu0 0.0
    %439 = vmatpush1.msra.mxu0 0.0
    %440 = vmatprep.subr.mxu0 0.0
    %441 = vmatpush1.msra.mxu0 0.0
    %442 = vmatprep.subr.mxu0 0.0
    %443 = vmatpush1.msra.mxu0 0.0
    %444 = vmatprep.subr.mxu0 0.0
    %445 = vmatpush1.msra.mxu0 0.0
    %446 = vmatprep.subr.mxu0 0.0
    %447 = vmatpush1.msra.mxu0 0.0
    %448 = vmatprep.mubr.f32.mxu0 0.0
    %449 = vmatmul.mubr.f32.gmra.mrb[0].mxu0 %v379
    %v450 = vpop.f32.mrb[0].mxu0
    %v451 = vadd.f32 %v383, %v450
    %v452 = vpop.f32.mrb[0].mxu0
    %453 = vdwg.mxu0
    %v454 = vtanh.pop %v451
    %v455 = vmul.f32 %v379, 0.5
    %v456 = vmul.f32 %v454, 0.5
    %v457 = vadd.f32 %v455, %v456
    %s458 = scalar_lea.vmem [#allocation8], 32
    %459 = vst [vmem:[%s458] sm:$0xff] %v457
    %s460 = scalar_lea.vmem [#allocation3], 40
    %v461 = vld [vmem:[%s460] sm:$0xff]
    %462 = vmatprep.subr.mxu0 0.0
    %463 = vmatpush1.msra.mxu0 %v55
    %464 = vmatprep.subr.mxu0 0.0
    %465 = vmatpush1.msra.mxu0 %v56
    %466 = vmatprep.subr.mxu0 0.0
    %467 = vmatpush1.msra.mxu0 %v57
    %468 = vmatprep.subr.mxu0 0.0
    %469 = vmatpush1.msra.mxu0 %v58
    %470 = vmatprep.subr.mxu0 0.0
    %471 = vmatpush1.msra.mxu0 %v59
    %472 = vmatprep.subr.mxu0 0.0
    %473 = vmatpush1.msra.mxu0 %v60
    %474 = vmatprep.subr.mxu0 0.0
    %475 = vmatpush1.msra.mxu0 %v61
    %476 = vmatprep.subr.mxu0 0.0
    %477 = vmatpush1.msra.mxu0 %v62
    %478 = vmatprep.subr.mxu0 0.0
    %479 = vmatpush1.msra.mxu0 %v63
    %480 = vmatprep.subr.mxu0 0.0
    %481 = vmatpush1.msra.mxu0 %v64
    %482 = vmatprep.subr.mxu0 0.0
    %483 = vmatpush1.msra.mxu0 %v65
    %484 = vmatprep.subr.mxu0 0.0
    %485 = vmatpush1.msra.mxu0 %v66
    %486 = vmatprep.subr.mxu0 0.0
    %487 = vmatpush1.msra.mxu0 %v67
    %488 = vmatprep.subr.mxu0 0.0
    %489 = vmatpush1.msra.mxu0 %v68
    %490 = vmatprep.subr.mxu0 0.0
    %491 = vmatpush1.msra.mxu0 %v69
    %492 = vmatprep.subr.mxu0 0.0
    %493 = vmatpush1.msra.mxu0 %v70
    %494 = vmatprep.subr.mxu0 0.0
    %495 = vmatpush1.msra.mxu0 0.0
    %496 = vmatprep.subr.mxu0 0.0
    %497 = vmatpush1.msra.mxu0 0.0
    %498 = vmatprep.subr.mxu0 0.0
    %499 = vmatpush1.msra.mxu0 0.0
    %500 = vmatprep.subr.mxu0 0.0
    %501 = vmatpush1.msra.mxu0 0.0
    %502 = vmatprep.subr.mxu0 0.0
    %503 = vmatpush1.msra.mxu0 0.0
    %504 = vmatprep.subr.mxu0 0.0
    %505 = vmatpush1.msra.mxu0 0.0
    %506 = vmatprep.subr.mxu0 0.0
    %507 = vmatpush1.msra.mxu0 0.0
    %508 = vmatprep.subr.mxu0 0.0
    %509 = vmatpush1.msra.mxu0 0.0
    %510 = vmatprep.subr.mxu0 0.0
    %511 = vmatpush1.msra.mxu0 0.0
    %512 = vmatprep.subr.mxu0 0.0
    %513 = vmatpush1.msra.mxu0 0.0
    %514 = vmatprep.subr.mxu0 0.0
    %515 = vmatpush1.msra.mxu0 0.0
    %516 = vmatprep.subr.mxu0 0.0
    %517 = vmatpush1.msra.mxu0 0.0
    %518 = vmatprep.subr.mxu0 0.0
    %519 = vmatpush1.msra.mxu0 0.0
    %520 = vmatprep.subr.mxu0 0.0
    %521 = vmatpush1.msra.mxu0 0.0
    %522 = vmatprep.subr.mxu0 0.0
    %523 = vmatpush1.msra.mxu0 0.0
    %524 = vmatprep.subr.mxu0 0.0
    %525 = vmatpush1.msra.mxu0 0.0
    %526 = vmatprep.mubr.f32.mxu0 0.0
    %527 = vmatmul.mubr.f32.gmra.mrb[0].mxu0 %v457
    %v528 = vpop.f32.mrb[0].mxu0
    %v529 = vadd.f32 %v461, %v528
    %v530 = vpop.f32.mrb[0].mxu0
    %531 = vdwg.mxu0
    %v532 = vtanh.pop %v529
    %v533 = vmul.f32 %v457, 0.5
    %v534 = vmul.f32 %v532, 0.5
    %v535 = vadd.f32 %v533, %v534
    %s536 = scalar_lea.vmem [#allocation8], 40
    %537 = vst [vmem:[%s536] sm:$0xff] %v535
    %s538 = scalar_lea.vmem [#allocation3], 48
    %v539 = vld [vmem:[%s538] sm:$0xff]
    %540 = vmatprep.subr.mxu0 0.0
    %541 = vmatpush1.msra.mxu0 %v55
    %542 = vmatprep.subr.mxu0 0.0
    %543 = vmatpush1.msra.mxu0 %v56
    %544 = vmatprep.subr.mxu0 0.0
    %545 = vmatpush1.msra.mxu0 %v57
    %546 = vmatprep.subr.mxu0 0.0
    %547 = vmatpush1.msra.mxu0 %v58
    %548 = vmatprep.subr.mxu0 0.0
    %549 = vmatpush1.msra.mxu0 %v59
    %550 = vmatprep.subr.mxu0 0.0
    %551 = vmatpush1.msra.mxu0 %v60
    %552 = vmatprep.subr.mxu0 0.0
    %553 = vmatpush1.msra.mxu0 %v61
    %554 = vmatprep.subr.mxu0 0.0
    %555 = vmatpush1.msra.mxu0 %v62
    %556 = vmatprep.subr.mxu0 0.0
    %557 = vmatpush1.msra.mxu0 %v63
    %558 = vmatprep.subr.mxu0 0.0
    %559 = vmatpush1.msra.mxu0 %v64
    %560 = vmatprep.subr.mxu0 0.0
    %561 = vmatpush1.msra.mxu0 %v65
    %562 = vmatprep.subr.mxu0 0.0
    %563 = vmatpush1.msra.mxu0 %v66
    %564 = vmatprep.subr.mxu0 0.0
    %565 = vmatpush1.msra.mxu0 %v67
    %566 = vmatprep.subr.mxu0 0.0
    %567 = vmatpush1.msra.mxu0 %v68
    %568 = vmatprep.subr.mxu0 0.0
    %569 = vmatpush1.msra.mxu0 %v69
    %570 = vmatprep.subr.mxu0 0.0
    %571 = vmatpush1.msra.mxu0 %v70
    %572 = vmatprep.subr.mxu0 0.0
    %573 = vmatpush1.msra.mxu0 0.0
    %574 = vmatprep.subr.mxu0 0.0
    %575 = vmatpush1.msra.mxu0 0.0
    %576 = vmatprep.subr.mxu0 0.0
    %577 = vmatpush1.msra.mxu0 0.0
    %578 = vmatprep.subr.mxu0 0.0
    %579 = vmatpush1.msra.mxu0 0.0
    %580 = vmatprep.subr.mxu0 0.0
    %581 = vmatpush1.msra.mxu0 0.0
    %582 = vmatprep.subr.mxu0 0.0
    %583 = vmatpush1.msra.mxu0 0.0
    %584 = vmatprep.subr.mxu0 0.0
    %585 = vmatpush1.msra.mxu0 0.0
    %586 = vmatprep.subr.mxu0 0.0
    %587 = vmatpush1.msra.mxu0 0.0
    %588 = vmatprep.subr.mxu0 0.0
    %589 = vmatpush1.msra.mxu0 0.0
    %590 = vmatprep.subr.mxu0 0.0
    %591 = vmatpush1.msra.mxu0 0.0
    %592 = vmatprep.subr.mxu0 0.0
    %593 = vmatpush1.msra.mxu0 0.0
    %594 = vmatprep.subr.mxu0 0.0
    %595 = vmatpush1.msra.mxu0 0.0
    %596 = vmatprep.subr.mxu0 0.0
    %597 = vmatpush1.msra.mxu0 0.0
    %598 = vmatprep.subr.mxu0 0.0
    %599 = vmatpush1.msra.mxu0 0.0
    %600 = vmatprep.subr.mxu0 0.0
    %601 = vmatpush1.msra.mxu0 0.0
    %602 = vmatprep.subr.mxu0 0.0
    %603 = vmatpush1.msra.mxu0 0.0
    %604 = vmatprep.mubr.f32.mxu0 0.0
    %605 = vmatmul.mubr.f32.gmra.mrb[0].mxu0 %v535
    %v606 = vpop.f32.mrb[0].mxu0
    %v607 = vadd.f32 %v539, %v606
    %v608 = vpop.f32.mrb[0].mxu0
    %609 = vdwg.mxu0
    %v610 = vtanh.pop %v607
    %v611 = vmul.f32 %v535, 0.5
    %v612 = vmul.f32 %v610, 0.5
    %v613 = vadd.f32 %v611, %v612
    %s614 = scalar_lea.vmem [#allocation8], 48
    %615 = vst [vmem:[%s614] sm:$0xff] %v613
    %s616 = scalar_lea.vmem [#allocation3], 56
    %v617 = vld [vmem:[%s616] sm:$0xff]
    %618 = vmatprep.subr.mxu0 0.0
    %619 = vmatpush1.msra.mxu0 %v55
    %620 = vmatprep.subr.mxu0 0.0
    %621 = vmatpush1.msra.mxu0 %v56
    %622 = vmatprep.subr.mxu0 0.0
    %623 = vmatpush1.msra.mxu0 %v57
    %624 = vmatprep.subr.mxu0 0.0
    %625 = vmatpush1.msra.mxu0 %v58
    %626 = vmatprep.subr.mxu0 0.0
    %627 = vmatpush1.msra.mxu0 %v59
    %628 = vmatprep.subr.mxu0 0.0
    %629 = vmatpush1.msra.mxu0 %v60
    %630 = vmatprep.subr.mxu0 0.0
    %631 = vmatpush1.msra.mxu0 %v61
    %632 = vmatprep.subr.mxu0 0.0
    %633 = vmatpush1.msra.mxu0 %v62
    %634 = vmatprep.subr.mxu0 0.0
    %635 = vmatpush1.msra.mxu0 %v63
    %636 = vmatprep.subr.mxu0 0.0
    %637 = vmatpush1.msra.mxu0 %v64
    %638 = vmatprep.subr.mxu0 0.0
    %639 = vmatpush1.msra.mxu0 %v65
    %640 = vmatprep.subr.mxu0 0.0
    %641 = vmatpush1.msra.mxu0 %v66
    %642 = vmatprep.subr.mxu0 0.0
    %643 = vmatpush1.msra.mxu0 %v67
    %644 = vmatprep.subr.mxu0 0.0
    %645 = vmatpush1.msra.mxu0 %v68
    %646 = vmatprep.subr.mxu0 0.0
    %647 = vmatpush1.msra.mxu0 %v69
    %648 = vmatprep.subr.mxu0 0.0
    %649 = vmatpush1.msra.mxu0 %v70
    %650 = vmatprep.subr.mxu0 0.0
    %651 = vmatpush1.msra.mxu0 0.0
    %652 = vmatprep.subr.mxu0 0.0
    %653 = vmatpush1.msra.mxu0 0.0
    %654 = vmatprep.subr.mxu0 0.0
    %655 = vmatpush1.msra.mxu0 0.0
    %656 = vmatprep.subr.mxu0 0.0
    %657 = vmatpush1.msra.mxu0 0.0
    %658 = vmatprep.subr.mxu0 0.0
    %659 = vmatpush1.msra.mxu0 0.0
    %660 = vmatprep.subr.mxu0 0.0
    %661 = vmatpush1.msra.mxu0 0.0
    %662 = vmatprep.subr.mxu0 0.0
    %663 = vmatpush1.msra.mxu0 0.0
    %664 = vmatprep.subr.mxu0 0.0
    %665 = vmatpush1.msra.mxu0 0.0
    %666 = vmatprep.subr.mxu0 0.0
    %667 = vmatpush1.msra.mxu0 0.0
    %668 = vmatprep.subr.mxu0 0.0
    %669 = vmatpush1.msra.mxu0 0.0
    %670 = vmatprep.subr.mxu0 0.0
    %671 = vmatpush1.msra.mxu0 0.0
    %672 = vmatprep.subr.mxu0 0.0
    %673 = vmatpush1.msra.mxu0 0.0
    %674 = vmatprep.subr.mxu0 0.0
    %675 = vmatpush1.msra.mxu0 0.0
    %676 = vmatprep.subr.mxu0 0.0
    %677 = vmatpush1.msra.mxu0 0.0
    %678 = vmatprep.subr.mxu0 0.0
    %679 = vmatpush1.msra.mxu0 0.0
    %680 = vmatprep.subr.mxu0 0.0
    %681 = vmatpush1.msra.mxu0 0.0
    %682 = vmatprep.mubr.f32.mxu0 0.0
    %683 = vmatmul.mubr.f32.gmra.mrb[0].mxu0 %v613
    %v684 = vpop.f32.mrb[0].mxu0
    %v685 = vadd.f32 %v617, %v684
    %v686 = vpop.f32.mrb[0].mxu0
    %687 = vdwg.mxu0
    %v688 = vtanh.pop %v685
    %v689 = vmul.f32 %v613, 0.5
    %v690 = vmul.f32 %v688, 0.5
    %v691 = vadd.f32 %v689, %v690
    %s692 = scalar_lea.vmem [#allocation8], 56
    %693 = vst [vmem:[%s692] sm:$0xff] %v691
    %694 = vst [vmem:[#allocation2] sm:$0xff] %v691
    // Predicated region
    $region26: #{tpu_custom_call.1} parent=1 // pred_check
      _
    $region27: #{tpu_custom_call.1} parent=1 // pred_check_branch
      %696 = sbr.rel (0) target = $region29
    $region28: #{tpu_custom_call.1} parent=1 // pred_region
      %s698 = ssub.s32 1024, 1024
      %699 = vsyncadd [#allocation5], %s698
      %s700 = sshll.u32 [#allocation8], 4
      %s701 = int_to_ptr.vmem [resolvable:$true] %s700
      %706 = dma.vmem_to_hbm [thread:$0]  %s701, 1024, %s3, [#allocation5], 128, 128, 8
    $region29: #{tpu_custom_call.1} parent=1 // pred_fallthru
      _
    // Predicated region
    $region30: #{tpu_custom_call.1} parent=1 // pred_check
      _
    $region31: #{tpu_custom_call.1} parent=1 // pred_check_branch
      %708 = sbr.rel (0) target = $region33
    $region32: #{tpu_custom_call.1} parent=1 // pred_region
      %709 = dma.done [#allocation5], 1024
    $region33: #{tpu_custom_call.1} parent=1 // pred_fallthru
      _
    %710 = vsyncpa [#allocation4], 1
    %711 = vsyncpa [#allocation7], 1
    %712 = vsyncpa [#allocation5], 1

</llo_original>
